<compile_context>
chip_gen: v7x
topology: tpu7x:2x2x1
jax: 0.10.0
libtpu: 0.0.40
codegen_flags: <defaults>
</compile_context>

<pallas_src>
import functools

import jax
import jax.numpy as jnp
from jax.experimental import pallas as pl
from jax.experimental.pallas import tpu as pltpu

INPUT_DIM = 128
HALF = INPUT_DIM // 2       # 64
HIDDEN = 64
STREAM_OUT = 32
FUSION = 128
N_ACTIONS = 4
HEAD_W = 8                  # packed head width: 4 probs | raise | value | 2 pad
LN_EPS = 1e-5               # nn.LayerNorm default eps
MASK_FILL = -100000000.0    # masked_fill value used by the PyTorch module
PAD_NEG = -1e9              # keeps the 4 padding head lanes out of the softmax


def _round_up(n, m):
    return ((n + m - 1) // m) * m


def _policy_kernel(
    x_ref, mask_ref,
    w1_ref, b1_ref, g_ref, beta_ref,
    w2_ref, b2_ref,
    fw_ref, fb_ref,
    hw_ref, hb_ref,
    temp_ref,
    out_ref,
):
    # --- two streams fused as one block-diagonal Linear(128 -> 128) ---
    z = jnp.dot(x_ref[...], w1_ref[...],
                preferred_element_type=jnp.float32) + b1_ref[...]
    # ELU (alpha = 1); clamp exp argument so the unselected branch stays finite.
    z = jnp.where(z > 0, z, jnp.exp(jnp.minimum(z, 0.0)) - 1.0)

    # --- per-stream LayerNorm(64) via masked reductions + lane selects ---
    lane = jax.lax.broadcasted_iota(jnp.int32, (1, INPUT_DIM), 1)
    left = lane < HALF
    inv_n = 1.0 / HALF
    zl = jnp.where(left, z, 0.0)
    zr = z - zl
    mu = jnp.where(left,
                   jnp.sum(zl, axis=-1, keepdims=True) * inv_n,
                   jnp.sum(zr, axis=-1, keepdims=True) * inv_n)
    d = z - mu
    d2 = d * d
    d2l = jnp.where(left, d2, 0.0)
    var = jnp.where(left,
                    jnp.sum(d2l, axis=-1, keepdims=True) * inv_n,
                    jnp.sum(d2 - d2l, axis=-1, keepdims=True) * inv_n)
    zn = d * jax.lax.rsqrt(var + LN_EPS) * g_ref[...] + beta_ref[...]

    # --- block-diagonal Linear(128 -> 64): output IS [hand_out | ctx_out] ---
    s = jnp.dot(zn.astype(w2_ref.dtype), w2_ref[...],
                preferred_element_type=jnp.float32) + b2_ref[...]

    # --- fusion Linear(64 -> 128) -> ReLU -> Dropout(0.2) (identity, eval) ---
    fused = jnp.dot(s.astype(fw_ref.dtype), fw_ref[...],
                    preferred_element_type=jnp.float32) + fb_ref[...]
    fused = jnp.maximum(fused, 0.0)

    # --- all three heads as one Linear(128 -> 8) ---
    h = jnp.dot(fused.astype(hw_ref.dtype), hw_ref[...],
                preferred_element_type=jnp.float32) + hb_ref[...]

    hlane = jax.lax.broadcasted_iota(jnp.int32, h.shape, 1)
    is_act = hlane < N_ACTIONS

    # action head: Tanhshrink -> / temperature -> masked_fill -> softmax (lanes 0..3)
    inv_t = 1.0 / temp_ref[0]
    logits = (h - jnp.tanh(h)) * inv_t
    legal = mask_ref[...] != 0
    logits = jnp.where(is_act, jnp.where(legal, logits, MASK_FILL), PAD_NEG)
    m = jnp.max(logits, axis=-1, keepdims=True)
    e = jnp.exp(logits - m)
    probs = e * pl.reciprocal(jnp.sum(e, axis=-1, keepdims=True))

    # raise head: Sigmoid (lane 4); value head: Tanh (lane 5); lanes 6-7 -> 0
    sig = pl.reciprocal(1.0 + jnp.exp(-h))
    tnh = jnp.tanh(h)

    out_ref[...] = jnp.where(is_act, probs,
                   jnp.where(hlane == N_ACTIONS, sig,
                   jnp.where(hlane == N_ACTIONS + 1, tnh, 0.0)))


def init_params(key):
    """Deterministic synthetic parameters, matching the nn.Module shapes."""
    ks = jax.random.split(key, 8)

    def lin(k, fan_in, fan_out):
        kw, kb = jax.random.split(k)
        bound = 1.0 / jnp.sqrt(fan_in)
        w = jax.random.uniform(kw, (fan_in, fan_out), jnp.float32, -bound, bound)
        b = jax.random.uniform(kb, (1, fan_out), jnp.float32, -bound, bound)
        return w, b

    p = {}
    p["h_w1"], p["h_b1"] = lin(ks[0], HALF, HIDDEN)
    p["h_g"] = jnp.ones((1, HIDDEN), jnp.float32)
    p["h_beta"] = jnp.zeros((1, HIDDEN), jnp.float32)
    p["h_w2"], p["h_b2"] = lin(ks[1], HIDDEN, STREAM_OUT)
    p["c_w1"], p["c_b1"] = lin(ks[2], HALF, HIDDEN)
    p["c_g"] = jnp.ones((1, HIDDEN), jnp.float32)
    p["c_beta"] = jnp.zeros((1, HIDDEN), jnp.float32)
    p["c_w2"], p["c_b2"] = lin(ks[3], HIDDEN, STREAM_OUT)
    p["f_w"], p["f_b"] = lin(ks[4], 2 * STREAM_OUT, FUSION)
    p["a_w"], p["a_b"] = lin(ks[5], FUSION, N_ACTIONS)
    p["r_w"], p["r_b"] = lin(ks[6], FUSION, 1)
    p["v_w"], p["v_b"] = lin(ks[7], FUSION, 1)
    p["temp"] = jnp.ones((1, 1), jnp.float32)   # nn.Parameter(torch.tensor([1.0]))
    return p


def fuse_params(p):
    """One-time weight prep: block-diagonal stream fusion, packed heads, bf16 matmul weights."""
    bf = jnp.bfloat16
    w1 = (jnp.zeros((INPUT_DIM, 2 * HIDDEN), jnp.float32)
          .at[:HALF, :HIDDEN].set(p["h_w1"])
          .at[HALF:, HIDDEN:].set(p["c_w1"]))
    w2 = (jnp.zeros((2 * HIDDEN, 2 * STREAM_OUT), jnp.float32)
          .at[:HIDDEN, :STREAM_OUT].set(p["h_w2"])
          .at[HIDDEN:, STREAM_OUT:].set(p["c_w2"]))
    n_pad = HEAD_W - N_ACTIONS - 2
    head_w = jnp.concatenate(
        [p["a_w"], p["r_w"], p["v_w"], jnp.zeros((FUSION, n_pad), jnp.float32)], axis=1)
    head_b = jnp.concatenate(
        [p["a_b"], p["r_b"], p["v_b"], jnp.zeros((1, n_pad), jnp.float32)], axis=1)
    return dict(
        w1=w1.astype(bf),
        b1=jnp.concatenate([p["h_b1"], p["c_b1"]], axis=1),
        gamma=jnp.concatenate([p["h_g"], p["c_g"]], axis=1),
        beta=jnp.concatenate([p["h_beta"], p["c_beta"]], axis=1),
        w2=w2.astype(bf),
        b2=jnp.concatenate([p["h_b2"], p["c_b2"]], axis=1),
        f_w=p["f_w"].astype(bf),
        f_b=p["f_b"],
        head_w=head_w.astype(bf),
        head_b=head_b,
        temp=p["temp"].reshape(-1)[:1],
    )


@functools.partial(jax.jit, static_argnames=("block_b",))
def poker_policy_net(x, fp, legal_mask=None, *, block_b=1024):
    B = x.shape[0]
    if legal_mask is None:
        legal_mask = jnp.ones((B, N_ACTIONS), jnp.float32)

    # Batch tile: multiple of 16 (bf16 sublane packing); pad B to a tile multiple.
    TB = min(block_b, _round_up(B, 16))
    Bp = _round_up(B, TB)

    xb = jnp.zeros((Bp, INPUT_DIM), jnp.bfloat16).at[:B].set(x.astype(jnp.bfloat16))
    mb = (jnp.zeros((Bp, HEAD_W), jnp.bfloat16)
          .at[:B, :N_ACTIONS].set(legal_mask.astype(jnp.bfloat16)))

    row_spec = lambda shape: pl.BlockSpec(shape, lambda i: (i, 0))
    const_spec = lambda shape: pl.BlockSpec(shape, lambda i: (0, 0))

    packed = pl.pallas_call(
        _policy_kernel,
        grid=(Bp // TB,),
        in_specs=[
            row_spec((TB, INPUT_DIM)),                    # x tile
            row_spec((TB, HEAD_W)),                       # legal mask (padded to 8)
            const_spec((INPUT_DIM, 2 * HIDDEN)),          # w1 block-diag (128,128)
            const_spec((1, 2 * HIDDEN)),                  # b1
            const_spec((1, 2 * HIDDEN)),                  # LN gamma
            const_spec((1, 2 * HIDDEN)),                  # LN beta
            const_spec((2 * HIDDEN, 2 * STREAM_OUT)),     # w2 block-diag (128,64)
            const_spec((1, 2 * STREAM_OUT)),              # b2
            const_spec((2 * STREAM_OUT, FUSION)),         # fusion weight (64,128)
            const_spec((1, FUSION)),                      # fusion bias
            const_spec((FUSION, HEAD_W)),                 # packed head weight (128,8)
            const_spec((1, HEAD_W)),                      # packed head bias
            pl.BlockSpec(memory_space=pltpu.MemorySpace.SMEM),  # temperature scalar
        ],
        out_specs=row_spec((TB, HEAD_W)),
        out_shape=jax.ShapeDtypeStruct((Bp, HEAD_W), jnp.float32),
        compiler_params=pltpu.CompilerParams(
            dimension_semantics=("parallel",)),
    )(xb, mb,
      fp["w1"], fp["b1"], fp["gamma"], fp["beta"],
      fp["w2"], fp["b2"], fp["f_w"], fp["f_b"],
      fp["head_w"], fp["head_b"], fp["temp"])

    probs = packed[:B, :N_ACTIONS]
    raise_ratio = packed[:B, N_ACTIONS]                       # squeeze(-1)
    value = packed[:B, N_ACTIONS + 1:N_ACTIONS + 2]
    return probs, raise_ratio, value


def _reference(x, params, legal_mask):
    """Pure-JAX reference with the original (unfused) structure; mirrors the
    kernel's dtype policy (bf16 matmul inputs, f32 accumulation/elementwise)."""
    p = params
    bf = jnp.bfloat16

    def mm(a, w):
        return jnp.dot(a.astype(bf), w.astype(bf), preferred_element_type=jnp.float32)

    def stream(h, w1, b1, g, beta, w2, b2):
        z = mm(h, w1) + b1
        z = jnp.where(z > 0, z, jnp.exp(z) - 1.0)
        mu = jnp.mean(z, -1, keepdims=True)
        var = jnp.mean((z - mu) ** 2, -1, keepdims=True)
        zn = (z - mu) * jax.lax.rsqrt(var + LN_EPS) * g + beta
        return mm(zn, w2) + b2

    hand = stream(x[:, :HALF], p["h_w1"], p["h_b1"], p["h_g"], p["h_beta"],
                  p["h_w2"], p["h_b2"])
    ctx = stream(x[:, HALF:], p["c_w1"], p["c_b1"], p["c_g"], p["c_beta"],
                 p["c_w2"], p["c_b2"])
    fused = jnp.maximum(mm(jnp.concatenate([hand, ctx], -1), p["f_w"]) + p["f_b"], 0.0)
    logits = mm(fused, p["a_w"]) + p["a_b"]
    logits = (logits - jnp.tanh(logits)) / p["temp"][0, 0]
    logits = jnp.where(legal_mask == 0.0, MASK_FILL, logits)
    probs = jax.nn.softmax(logits, axis=-1)
    raise_r = jax.nn.sigmoid(mm(fused, p["r_w"]) + p["r_b"])[:, 0]
    value = jnp.tanh(mm(fused, p["v_w"]) + p["v_b"])
    return probs, raise_r, value


if __name__ == "__main__":
    key = jax.random.PRNGKey(0)
    k_x, k_p, k_x2, k_m2 = jax.random.split(key, 4)

    params = init_params(k_p)
    fp = fuse_params(params)

    # Small batch (exercises tail padding: B=2 -> one 16-row tile).
    B = 2
    x = jax.random.normal(k_x, (B, INPUT_DIM), jnp.float32)
    legal_mask = jnp.array([[1.0, 1.0, 1.0, 1.0],
                            [0.0, 1.0, 1.0, 0.0]], jnp.float32)
    probs, raise_ratio, value = poker_policy_net(x, fp, legal_mask)
    jax.block_until_ready((probs, raise_ratio, value))

    ref_probs, ref_raise, ref_value = _reference(x, params, legal_mask)
    assert probs.shape == (B, N_ACTIONS)
    assert raise_ratio.shape == (B,)
    assert value.shape == (B, 1)
    assert jnp.allclose(probs, ref_probs, atol=5e-4, rtol=5e-4)
    assert jnp.allclose(raise_ratio, ref_raise, atol=5e-4, rtol=5e-4)
    assert jnp.allclose(value, ref_value, atol=5e-4, rtol=5e-4)
    assert jnp.allclose(jnp.sum(probs, axis=-1), 1.0, atol=1e-5)

    # Ragged larger batch with a small tile -> multi-step grid + tail padding.
    B2 = 37
    x2 = jax.random.normal(k_x2, (B2, INPUT_DIM), jnp.float32)
    mask2 = (jax.random.uniform(k_m2, (B2, N_ACTIONS)) > 0.3).astype(jnp.float32)
    probs2, raise2, value2 = poker_policy_net(x2, fp, mask2, block_b=16)
    jax.block_until_ready((probs2, raise2, value2))
    rp2, rr2, rv2 = _reference(x2, params, mask2)
    assert jnp.allclose(probs2, rp2, atol=5e-4, rtol=5e-4)
    assert jnp.allclose(raise2, rr2, atol=5e-4, rtol=5e-4)
    assert jnp.allclose(value2, rv2, atol=5e-4, rtol=5e-4)

    print("KERNEL_OK")
</pallas_src>

<mosaic_0001>
module attributes {stable_mosaic.version = 11 : i64} {
  func.func @_policy_kernel(%arg0: i32, %arg1: memref<16x128xbf16, #tpu.memory_space<vmem>>, %arg2: memref<16x8xbf16, #tpu.memory_space<vmem>>, %arg3: memref<128x128xbf16, #tpu.memory_space<vmem>>, %arg4: memref<1x128xf32, #tpu.memory_space<vmem>>, %arg5: memref<1x128xf32, #tpu.memory_space<vmem>>, %arg6: memref<1x128xf32, #tpu.memory_space<vmem>>, %arg7: memref<128x64xbf16, #tpu.memory_space<vmem>>, %arg8: memref<1x64xf32, #tpu.memory_space<vmem>>, %arg9: memref<64x128xbf16, #tpu.memory_space<vmem>>, %arg10: memref<1x128xf32, #tpu.memory_space<vmem>>, %arg11: memref<128x8xbf16, #tpu.memory_space<vmem>>, %arg12: memref<1x8xf32, #tpu.memory_space<vmem>>, %arg13: memref<1xf32, #tpu.memory_space<smem>>, %arg14: memref<16x8xf32, #tpu.memory_space<vmem>>) attributes {dimension_semantics = [#tpu.dimension_semantics<parallel>], iteration_bounds = array<i64: 1>, scalar_prefetch = 0 : i64, scratch_operands = 0 : i64, tpu.core_type = #tpu.core_type<tc>, window_params = [{transform_indices = @transform_0, window_bounds = array<i64: 16, 128>}, {transform_indices = @transform_1, window_bounds = array<i64: 16, 8>}, {pipeline_mode = #tpu.pipeline_mode<synchronous>, transform_indices = @transform_2, window_bounds = array<i64: 128, 128>}, {pipeline_mode = #tpu.pipeline_mode<synchronous>, transform_indices = @transform_3, window_bounds = array<i64: 1, 128>}, {pipeline_mode = #tpu.pipeline_mode<synchronous>, transform_indices = @transform_4, window_bounds = array<i64: 1, 128>}, {pipeline_mode = #tpu.pipeline_mode<synchronous>, transform_indices = @transform_5, window_bounds = array<i64: 1, 128>}, {pipeline_mode = #tpu.pipeline_mode<synchronous>, transform_indices = @transform_6, window_bounds = array<i64: 128, 64>}, {pipeline_mode = #tpu.pipeline_mode<synchronous>, transform_indices = @transform_7, window_bounds = array<i64: 1, 64>}, {pipeline_mode = #tpu.pipeline_mode<synchronous>, transform_indices = @transform_8, window_bounds = array<i64: 64, 128>}, {pipeline_mode = #tpu.pipeline_mode<synchronous>, transform_indices = @transform_9, window_bounds = array<i64: 1, 128>}, {pipeline_mode = #tpu.pipeline_mode<synchronous>, transform_indices = @transform_10, window_bounds = array<i64: 128, 8>}, {pipeline_mode = #tpu.pipeline_mode<synchronous>, transform_indices = @transform_11, window_bounds = array<i64: 1, 8>}, {transform_indices = @transform_12, window_bounds = array<i64: 1>}, {transform_indices = @transform_13, window_bounds = array<i64: 16, 8>}]} {
    %c0 = arith.constant 0 : index
    %c0_0 = arith.constant 0 : index
    %0 = vector.load %arg1[%c0, %c0_0] : memref<16x128xbf16, #tpu.memory_space<vmem>>, vector<16x128xbf16>
    %c0_1 = arith.constant 0 : index
    %c0_2 = arith.constant 0 : index
    %1 = vector.load %arg3[%c0_1, %c0_2] : memref<128x128xbf16, #tpu.memory_space<vmem>>, vector<128x128xbf16>
    %cst = arith.constant dense<0.000000e+00> : vector<16x128xf32>
    %2 = tpu.matmul %0, %1, %cst {dimension_numbers = #tpu.dot_dimension_numbers<[1], [0], [0], [1], [0, 0, 1, 1], [], []>} : vector<16x128xbf16>, vector<128x128xbf16>, vector<16x128xf32> -> vector<16x128xf32>
    %c0_3 = arith.constant 0 : index
    %c0_4 = arith.constant 0 : index
    %3 = vector.load %arg4[%c0_3, %c0_4] : memref<1x128xf32, #tpu.memory_space<vmem>>, vector<1x128xf32>
    %4 = vector.broadcast %3 : vector<1x128xf32> to vector<16x128xf32>
    %5 = arith.addf %2, %4 : vector<16x128xf32>
    %cst_5 = arith.constant 0.000000e+00 : f32
    %6 = vector.broadcast %cst_5 : f32 to vector<16x128xf32>
    %7 = arith.cmpf ogt, %5, %6 : vector<16x128xf32>
    %cst_6 = arith.constant 0.000000e+00 : f32
    %8 = vector.broadcast %cst_6 : f32 to vector<16x128xf32>
    %9 = arith.minimumf %5, %8 : vector<16x128xf32>
    %10 = math.exp %9 : vector<16x128xf32>
    %cst_7 = arith.constant 1.000000e+00 : f32
    %11 = vector.broadcast %cst_7 : f32 to vector<16x128xf32>
    %12 = arith.subf %10, %11 : vector<16x128xf32>
    %13 = arith.select %7, %5, %12 : vector<16x128xi1>, vector<16x128xf32>
    %14 = tpu.iota {dimensions = array<i32: 1>} : vector<1x128xi32>
    %c64_i32 = arith.constant 64 : i32
    %15 = vector.broadcast %c64_i32 : i32 to vector<1x128xi32>
    %16 = arith.cmpi slt, %14, %15 : vector<1x128xi32>
    %cst_8 = arith.constant 0.000000e+00 : f32
    %17 = vector.shape_cast %16 : vector<1x128xi1> to vector<1x128xi1>
    %18 = vector.broadcast %17 : vector<1x128xi1> to vector<16x128xi1>
    %19 = vector.broadcast %cst_8 : f32 to vector<16x128xf32>
    %20 = arith.select %18, %13, %19 : vector<16x128xi1>, vector<16x128xf32>
    %21 = arith.subf %13, %20 : vector<16x128xf32>
    %cst_9 = arith.constant dense<0.000000e+00> : vector<16xf32>
    %22 = vector.multi_reduction <add>, %20, %cst_9 [1] : vector<16x128xf32> to vector<16xf32>
    %23 = vector.shape_cast %22 : vector<16xf32> to vector<16x1xf32>
    %cst_10 = arith.constant 1.562500e-02 : f32
    %24 = vector.broadcast %cst_10 : f32 to vector<16x1xf32>
    %25 = arith.mulf %23, %24 : vector<16x1xf32>
    %cst_11 = arith.constant dense<0.000000e+00> : vector<16xf32>
    %26 = vector.multi_reduction <add>, %21, %cst_11 [1] : vector<16x128xf32> to vector<16xf32>
    %27 = vector.shape_cast %26 : vector<16xf32> to vector<16x1xf32>
    %cst_12 = arith.constant 1.562500e-02 : f32
    %28 = vector.broadcast %cst_12 : f32 to vector<16x1xf32>
    %29 = arith.mulf %27, %28 : vector<16x1xf32>
    %30 = vector.shape_cast %16 : vector<1x128xi1> to vector<1x128xi1>
    %31 = vector.broadcast %30 : vector<1x128xi1> to vector<16x128xi1>
    %32 = vector.shape_cast %25 : vector<16x1xf32> to vector<16x1xf32>
    %33 = vector.broadcast %32 : vector<16x1xf32> to vector<16x128xf32>
    %34 = vector.shape_cast %29 : vector<16x1xf32> to vector<16x1xf32>
    %35 = vector.broadcast %34 : vector<16x1xf32> to vector<16x128xf32>
    %36 = arith.select %31, %33, %35 : vector<16x128xi1>, vector<16x128xf32>
    %37 = arith.subf %13, %36 : vector<16x128xf32>
    %38 = arith.mulf %37, %37 : vector<16x128xf32>
    %cst_13 = arith.constant 0.000000e+00 : f32
    %39 = vector.shape_cast %16 : vector<1x128xi1> to vector<1x128xi1>
    %40 = vector.broadcast %39 : vector<1x128xi1> to vector<16x128xi1>
    %41 = vector.broadcast %cst_13 : f32 to vector<16x128xf32>
    %42 = arith.select %40, %38, %41 : vector<16x128xi1>, vector<16x128xf32>
    %cst_14 = arith.constant dense<0.000000e+00> : vector<16xf32>
    %43 = vector.multi_reduction <add>, %42, %cst_14 [1] : vector<16x128xf32> to vector<16xf32>
    %44 = vector.shape_cast %43 : vector<16xf32> to vector<16x1xf32>
    %cst_15 = arith.constant 1.562500e-02 : f32
    %45 = vector.broadcast %cst_15 : f32 to vector<16x1xf32>
    %46 = arith.mulf %44, %45 : vector<16x1xf32>
    %47 = arith.subf %38, %42 : vector<16x128xf32>
    %cst_16 = arith.constant dense<0.000000e+00> : vector<16xf32>
    %48 = vector.multi_reduction <add>, %47, %cst_16 [1] : vector<16x128xf32> to vector<16xf32>
    %49 = vector.shape_cast %48 : vector<16xf32> to vector<16x1xf32>
    %cst_17 = arith.constant 1.562500e-02 : f32
    %50 = vector.broadcast %cst_17 : f32 to vector<16x1xf32>
    %51 = arith.mulf %49, %50 : vector<16x1xf32>
    %52 = vector.shape_cast %16 : vector<1x128xi1> to vector<1x128xi1>
    %53 = vector.broadcast %52 : vector<1x128xi1> to vector<16x128xi1>
    %54 = vector.shape_cast %46 : vector<16x1xf32> to vector<16x1xf32>
    %55 = vector.broadcast %54 : vector<16x1xf32> to vector<16x128xf32>
    %56 = vector.shape_cast %51 : vector<16x1xf32> to vector<16x1xf32>
    %57 = vector.broadcast %56 : vector<16x1xf32> to vector<16x128xf32>
    %58 = arith.select %53, %55, %57 : vector<16x128xi1>, vector<16x128xf32>
    %cst_18 = arith.constant 9.99999974E-6 : f32
    %59 = vector.broadcast %cst_18 : f32 to vector<16x128xf32>
    %60 = arith.addf %58, %59 : vector<16x128xf32>
    %61 = math.rsqrt %60 : vector<16x128xf32>
    %62 = arith.mulf %37, %61 : vector<16x128xf32>
    %c0_19 = arith.constant 0 : index
    %c0_20 = arith.constant 0 : index
    %63 = vector.load %arg5[%c0_19, %c0_20] : memref<1x128xf32, #tpu.memory_space<vmem>>, vector<1x128xf32>
    %64 = vector.broadcast %63 : vector<1x128xf32> to vector<16x128xf32>
    %65 = arith.mulf %62, %64 : vector<16x128xf32>
    %c0_21 = arith.constant 0 : index
    %c0_22 = arith.constant 0 : index
    %66 = vector.load %arg6[%c0_21, %c0_22] : memref<1x128xf32, #tpu.memory_space<vmem>>, vector<1x128xf32>
    %67 = vector.broadcast %66 : vector<1x128xf32> to vector<16x128xf32>
    %68 = arith.addf %65, %67 : vector<16x128xf32>
    %69 = arith.truncf %68 : vector<16x128xf32> to vector<16x128xbf16>
    %c0_23 = arith.constant 0 : index
    %c0_24 = arith.constant 0 : index
    %70 = vector.load %arg7[%c0_23, %c0_24] : memref<128x64xbf16, #tpu.memory_space<vmem>>, vector<128x64xbf16>
    %cst_25 = arith.constant dense<0.000000e+00> : vector<16x64xf32>
    %71 = tpu.matmul %69, %70, %cst_25 {dimension_numbers = #tpu.dot_dimension_numbers<[1], [0], [0], [1], [0, 0, 1, 1], [], []>} : vector<16x128xbf16>, vector<128x64xbf16>, vector<16x64xf32> -> vector<16x64xf32>
    %c0_26 = arith.constant 0 : index
    %c0_27 = arith.constant 0 : index
    %72 = vector.load %arg8[%c0_26, %c0_27] : memref<1x64xf32, #tpu.memory_space<vmem>>, vector<1x64xf32>
    %73 = vector.broadcast %72 : vector<1x64xf32> to vector<16x64xf32>
    %74 = arith.addf %71, %73 : vector<16x64xf32>
    %75 = arith.truncf %74 : vector<16x64xf32> to vector<16x64xbf16>
    %c0_28 = arith.constant 0 : index
    %c0_29 = arith.constant 0 : index
    %76 = vector.load %arg9[%c0_28, %c0_29] : memref<64x128xbf16, #tpu.memory_space<vmem>>, vector<64x128xbf16>
    %cst_30 = arith.constant dense<0.000000e+00> : vector<16x128xf32>
    %77 = tpu.matmul %75, %76, %cst_30 {dimension_numbers = #tpu.dot_dimension_numbers<[1], [0], [0], [1], [0, 0, 1, 1], [], []>} : vector<16x64xbf16>, vector<64x128xbf16>, vector<16x128xf32> -> vector<16x128xf32>
    %c0_31 = arith.constant 0 : index
    %c0_32 = arith.constant 0 : index
    %78 = vector.load %arg10[%c0_31, %c0_32] : memref<1x128xf32, #tpu.memory_space<vmem>>, vector<1x128xf32>
    %79 = vector.broadcast %78 : vector<1x128xf32> to vector<16x128xf32>
    %80 = arith.addf %77, %79 : vector<16x128xf32>
    %cst_33 = arith.constant 0.000000e+00 : f32
    %81 = vector.broadcast %cst_33 : f32 to vector<16x128xf32>
    %82 = arith.maximumf %80, %81 : vector<16x128xf32>
    %83 = arith.truncf %82 : vector<16x128xf32> to vector<16x128xbf16>
    %c0_34 = arith.constant 0 : index
    %c0_35 = arith.constant 0 : index
    %84 = vector.load %arg11[%c0_34, %c0_35] : memref<128x8xbf16, #tpu.memory_space<vmem>>, vector<128x8xbf16>
    %cst_36 = arith.constant dense<0.000000e+00> : vector<16x8xf32>
    %85 = tpu.matmul %83, %84, %cst_36 {dimension_numbers = #tpu.dot_dimension_numbers<[1], [0], [0], [1], [0, 0, 1, 1], [], []>} : vector<16x128xbf16>, vector<128x8xbf16>, vector<16x8xf32> -> vector<16x8xf32>
    %c0_37 = arith.constant 0 : index
    %c0_38 = arith.constant 0 : index
    %86 = vector.load %arg12[%c0_37, %c0_38] : memref<1x8xf32, #tpu.memory_space<vmem>>, vector<1x8xf32>
    %87 = vector.broadcast %86 : vector<1x8xf32> to vector<16x8xf32>
    %88 = arith.addf %85, %87 : vector<16x8xf32>
    %89 = tpu.iota {dimensions = array<i32: 1>} : vector<16x8xi32>
    %c4_i32 = arith.constant 4 : i32
    %90 = vector.broadcast %c4_i32 : i32 to vector<16x8xi32>
    %91 = arith.cmpi slt, %89, %90 : vector<16x8xi32>
    %c0_39 = arith.constant 0 : index
    %92 = memref.load %arg13[%c0_39] : memref<1xf32, #tpu.memory_space<smem>>
    %cst_40 = arith.constant 1.000000e+00 : f32
    %93 = arith.divf %cst_40, %92 : f32
    %94 = math.tanh %88 : vector<16x8xf32>
    %95 = arith.subf %88, %94 : vector<16x8xf32>
    %96 = vector.broadcast %93 : f32 to vector<16x8xf32>
    %97 = arith.mulf %95, %96 : vector<16x8xf32>
    %c0_41 = arith.constant 0 : index
    %c0_42 = arith.constant 0 : index
    %98 = vector.load %arg2[%c0_41, %c0_42] : memref<16x8xbf16, #tpu.memory_space<vmem>>, vector<16x8xbf16>
    %cst_43 = arith.constant 0.000000e+00 : bf16
    %99 = vector.broadcast %cst_43 : bf16 to vector<16x8xbf16>
    %100 = arith.cmpf one, %98, %99 : vector<16x8xbf16>
    %cst_44 = arith.constant -1.000000e+08 : f32
    %101 = vector.broadcast %cst_44 : f32 to vector<16x8xf32>
    %102 = arith.select %100, %97, %101 : vector<16x8xi1>, vector<16x8xf32>
    %cst_45 = arith.constant -1.000000e+09 : f32
    %103 = vector.broadcast %cst_45 : f32 to vector<16x8xf32>
    %104 = arith.select %91, %102, %103 : vector<16x8xi1>, vector<16x8xf32>
    %cst_46 = arith.constant dense<0xFF800000> : vector<16xf32>
    %105 = vector.multi_reduction <maximumf>, %104, %cst_46 [1] : vector<16x8xf32> to vector<16xf32>
    %106 = vector.shape_cast %105 : vector<16xf32> to vector<16x1xf32>
    %107 = vector.broadcast %106 : vector<16x1xf32> to vector<16x8xf32>
    %108 = arith.subf %104, %107 : vector<16x8xf32>
    %109 = math.exp %108 : vector<16x8xf32>
    %cst_47 = arith.constant dense<0.000000e+00> : vector<16xf32>
    %110 = vector.multi_reduction <add>, %109, %cst_47 [1] : vector<16x8xf32> to vector<16xf32>
    %111 = vector.shape_cast %110 : vector<16xf32> to vector<16x1xf32>
    %112 = tpu.reciprocal %111 : vector<16x1xf32> -> vector<16x1xf32>
    %113 = vector.broadcast %112 : vector<16x1xf32> to vector<16x8xf32>
    %114 = arith.mulf %109, %113 : vector<16x8xf32>
    %cst_48 = arith.constant 0.000000e+00 : f32
    %115 = vector.broadcast %cst_48 : f32 to vector<16x8xf32>
    %116 = arith.subf %115, %88 : vector<16x8xf32>
    %117 = math.exp %116 : vector<16x8xf32>
    %cst_49 = arith.constant 1.000000e+00 : f32
    %118 = vector.broadcast %cst_49 : f32 to vector<16x8xf32>
    %119 = arith.addf %118, %117 : vector<16x8xf32>
    %120 = tpu.reciprocal %119 : vector<16x8xf32> -> vector<16x8xf32>
    %121 = math.tanh %88 : vector<16x8xf32>
    %c4_i32_50 = arith.constant 4 : i32
    %122 = vector.broadcast %c4_i32_50 : i32 to vector<16x8xi32>
    %123 = arith.cmpi eq, %89, %122 : vector<16x8xi32>
    %c5_i32 = arith.constant 5 : i32
    %124 = vector.broadcast %c5_i32 : i32 to vector<16x8xi32>
    %125 = arith.cmpi eq, %89, %124 : vector<16x8xi32>
    %cst_51 = arith.constant 0.000000e+00 : f32
    %126 = vector.broadcast %cst_51 : f32 to vector<16x8xf32>
    %127 = arith.select %125, %121, %126 : vector<16x8xi1>, vector<16x8xf32>
    %128 = arith.select %123, %120, %127 : vector<16x8xi1>, vector<16x8xf32>
    %129 = arith.select %91, %114, %128 : vector<16x8xi1>, vector<16x8xf32>
    %c0_52 = arith.constant 0 : index
    %c0_53 = arith.constant 0 : index
    %130 = vector.load %arg14[%c0_52, %c0_53] : memref<16x8xf32, #tpu.memory_space<vmem>>, vector<16x8xf32>
    tpu.vector_store %arg14[%c0_52, %c0_53], %129 {strides = array<i32>} : memref<16x8xf32, #tpu.memory_space<vmem>>, vector<16x8xf32>,
    return
  }
  func.func @transform_0(%arg0: i32) -> (i32, i32) {
    %c0_i32 = arith.constant 0 : i32
    %c0_i32_0 = arith.constant 0 : i32
    return %arg0, %c0_i32 : i32, i32
  }
  func.func @transform_1(%arg0: i32) -> (i32, i32) {
    %c0_i32 = arith.constant 0 : i32
    %c0_i32_0 = arith.constant 0 : i32
    return %arg0, %c0_i32 : i32, i32
  }
  func.func @transform_2(%arg0: i32) -> (i32, i32) {
    %c0_i32 = arith.constant 0 : i32
    %c0_i32_0 = arith.constant 0 : i32
    %c0_i32_1 = arith.constant 0 : i32
    return %c0_i32, %c0_i32_0 : i32, i32
  }
  func.func @transform_3(%arg0: i32) -> (i32, i32) {
    %c0_i32 = arith.constant 0 : i32
    %c0_i32_0 = arith.constant 0 : i32
    %c0_i32_1 = arith.constant 0 : i32
    return %c0_i32, %c0_i32_0 : i32, i32
  }
  func.func @transform_4(%arg0: i32) -> (i32, i32) {
    %c0_i32 = arith.constant 0 : i32
    %c0_i32_0 = arith.constant 0 : i32
    %c0_i32_1 = arith.constant 0 : i32
    return %c0_i32, %c0_i32_0 : i32, i32
  }
  func.func @transform_5(%arg0: i32) -> (i32, i32) {
    %c0_i32 = arith.constant 0 : i32
    %c0_i32_0 = arith.constant 0 : i32
    %c0_i32_1 = arith.constant 0 : i32
    return %c0_i32, %c0_i32_0 : i32, i32
  }
  func.func @transform_6(%arg0: i32) -> (i32, i32) {
    %c0_i32 = arith.constant 0 : i32
    %c0_i32_0 = arith.constant 0 : i32
    %c0_i32_1 = arith.constant 0 : i32
    return %c0_i32, %c0_i32_0 : i32, i32
  }
  func.func @transform_7(%arg0: i32) -> (i32, i32) {
    %c0_i32 = arith.constant 0 : i32
    %c0_i32_0 = arith.constant 0 : i32
    %c0_i32_1 = arith.constant 0 : i32
    return %c0_i32, %c0_i32_0 : i32, i32
  }
  func.func @transform_8(%arg0: i32) -> (i32, i32) {
    %c0_i32 = arith.constant 0 : i32
    %c0_i32_0 = arith.constant 0 : i32
    %c0_i32_1 = arith.constant 0 : i32
    return %c0_i32, %c0_i32_0 : i32, i32
  }
  func.func @transform_9(%arg0: i32) -> (i32, i32) {
    %c0_i32 = arith.constant 0 : i32
    %c0_i32_0 = arith.constant 0 : i32
    %c0_i32_1 = arith.constant 0 : i32
    return %c0_i32, %c0_i32_0 : i32, i32
  }
  func.func @transform_10(%arg0: i32) -> (i32, i32) {
    %c0_i32 = arith.constant 0 : i32
    %c0_i32_0 = arith.constant 0 : i32
    %c0_i32_1 = arith.constant 0 : i32
    return %c0_i32, %c0_i32_0 : i32, i32
  }
  func.func @transform_11(%arg0: i32) -> (i32, i32) {
    %c0_i32 = arith.constant 0 : i32
    %c0_i32_0 = arith.constant 0 : i32
    %c0_i32_1 = arith.constant 0 : i32
    return %c0_i32, %c0_i32_0 : i32, i32
  }
  func.func @transform_12(%arg0: i32) -> i32 {
    %c0_i32 = arith.constant 0 : i32
    %c0_i32_0 = arith.constant 0 : i32
    return %c0_i32 : i32
  }
  func.func @transform_13(%arg0: i32) -> (i32, i32) {
    %c0_i32 = arith.constant 0 : i32
    %c0_i32_0 = arith.constant 0 : i32
    return %arg0, %c0_i32 : i32, i32
  }
}

</mosaic_0001>

<llo_original>
// kernel: poker_policy_net.1
$region0: #{poker_policy_net.1}
  #allocation0 [shape = 'u32[]', space=smem, size = 0x4, offset = 0x4, fixed_abs, tag = 'smem constant byte address 0x4 - core index']
  #allocation1 [shape = 'u32[144,128]{1,0:T(1,128)}', space=vmem, size = 0x12000, scoped, tag = 'internal scratch']
  #allocation2 [shape = 'f32[1]{0:T(128)S(6)}', space=smem, size = 0x200, scoped, tag = 'scoped memory for poker_policy_net.1']
  %s0 = inlined_call_operand.vmem [shape: bf16[16,128], index: 0, kind: input, shape index: {}]
  %s1 = inlined_call_operand.vmem [shape: bf16[16,8], index: 1, kind: input, shape index: {}]
  %s2 = inlined_call_operand.vmem [shape: bf16[128,128], index: 2, kind: input, shape index: {}]
  %s3 = inlined_call_operand.vmem [shape: f32[1,128], index: 3, kind: input, shape index: {}]
  %s4 = inlined_call_operand.vmem [shape: f32[1,128], index: 4, kind: input, shape index: {}]
  %s5 = inlined_call_operand.vmem [shape: f32[1,128], index: 5, kind: input, shape index: {}]
  %s6 = inlined_call_operand.vmem [shape: bf16[128,64], index: 6, kind: input, shape index: {}]
  %s7 = inlined_call_operand.vmem [shape: f32[1,64], index: 7, kind: input, shape index: {}]
  %s8 = inlined_call_operand.vmem [shape: bf16[64,128], index: 8, kind: input, shape index: {}]
  %s9 = inlined_call_operand.vmem [shape: f32[1,128], index: 9, kind: input, shape index: {}]
  %s10 = inlined_call_operand.vmem [shape: bf16[128,8], index: 10, kind: input, shape index: {}]
  %s11 = inlined_call_operand.vmem [shape: f32[1,8], index: 11, kind: input, shape index: {}]
  %s12 = inlined_call_operand.<no memory space> [shape: f32[1], index: 12, kind: input, shape index: {}]
  %s13 = inlined_call_operand.vmem [shape: f32[16,8], index: 13, kind: output, shape index: {}]
  %s14 = sld [smem:[#allocation0]]
  $region62: #{poker_policy_net.1} parent=0
    _
  %s16 = ssub.s32 1, %s14
  %s17 = scalar_select 0, %s16, %s14
  %18 = sst [smem:[#allocation2]] %s12
  // Predicated region
  $region2: #{poker_policy_net.1} parent=0 // pred_check
    _
  $region3: #{poker_policy_net.1} parent=0 // pred_check_branch
    %20 = sbr.rel (0) target = $region5
  $region4: #{poker_policy_net.1} parent=0 // pred_region
    _
  $region5: #{poker_policy_net.1} parent=0 // pred_fallthru
    _
  // Predicated region
  $region6: #{poker_policy_net.1} parent=0 // pred_check
    _
  $region7: #{poker_policy_net.1} parent=0 // pred_check_branch
    %22 = sbr.rel (0) target = $region9
  $region8: #{poker_policy_net.1} parent=0 // pred_region
    _
  $region9: #{poker_policy_net.1} parent=0 // pred_fallthru
    _
  // Predicated region
  $region10: #{poker_policy_net.1} parent=0 // pred_check
    _
  $region11: #{poker_policy_net.1} parent=0 // pred_check_branch
    %24 = sbr.rel (0) target = $region13
  $region12: #{poker_policy_net.1} parent=0 // pred_region
    _
  $region13: #{poker_policy_net.1} parent=0 // pred_fallthru
    _
  // Predicated region
  $region14: #{poker_policy_net.1} parent=0 // pred_check
    _
  $region15: #{poker_policy_net.1} parent=0 // pred_check_branch
    %26 = sbr.rel (0) target = $region17
  $region16: #{poker_policy_net.1} parent=0 // pred_region
    _
  $region17: #{poker_policy_net.1} parent=0 // pred_fallthru
    _
  // Predicated region
  $region18: #{poker_policy_net.1} parent=0 // pred_check
    _
  $region19: #{poker_policy_net.1} parent=0 // pred_check_branch
    %28 = sbr.rel (0) target = $region21
  $region20: #{poker_policy_net.1} parent=0 // pred_region
    _
  $region21: #{poker_policy_net.1} parent=0 // pred_fallthru
    _
  // Predicated region
  $region22: #{poker_policy_net.1} parent=0 // pred_check
    _
  $region23: #{poker_policy_net.1} parent=0 // pred_check_branch
    %30 = sbr.rel (0) target = $region25
  $region24: #{poker_policy_net.1} parent=0 // pred_region
    _
  $region25: #{poker_policy_net.1} parent=0 // pred_fallthru
    _
  // Predicated region
  $region26: #{poker_policy_net.1} parent=0 // pred_check
    _
  $region27: #{poker_policy_net.1} parent=0 // pred_check_branch
    %32 = sbr.rel (0) target = $region29
  $region28: #{poker_policy_net.1} parent=0 // pred_region
    _
  $region29: #{poker_policy_net.1} parent=0 // pred_fallthru
    _
  // Predicated region
  $region30: #{poker_policy_net.1} parent=0 // pred_check
    _
  $region31: #{poker_policy_net.1} parent=0 // pred_check_branch
    %34 = sbr.rel (0) target = $region33
  $region32: #{poker_policy_net.1} parent=0 // pred_region
    _
  $region33: #{poker_policy_net.1} parent=0 // pred_fallthru
    _
  // Predicated region
  $region34: #{poker_policy_net.1} parent=0 // pred_check
    _
  $region35: #{poker_policy_net.1} parent=0 // pred_check_branch
    %36 = sbr.rel (0) target = $region37
  $region36: #{poker_policy_net.1} parent=0 // pred_region
    _
  $region37: #{poker_policy_net.1} parent=0 // pred_fallthru
    _
  // Predicated region
  $region38: #{poker_policy_net.1} parent=0 // pred_check
    _
  $region39: #{poker_policy_net.1} parent=0 // pred_check_branch
    %38 = sbr.rel (0) target = $region41
  $region40: #{poker_policy_net.1} parent=0 // pred_region
    _
  $region41: #{poker_policy_net.1} parent=0 // pred_fallthru
    _
  // Predicated region
  $region42: #{poker_policy_net.1} parent=0 // pred_check
    _
  $region43: #{poker_policy_net.1} parent=0 // pred_check_branch
    %40 = sbr.rel (0) target = $region45
  $region44: #{poker_policy_net.1} parent=0 // pred_region
    _
  $region45: #{poker_policy_net.1} parent=0 // pred_fallthru
    _
  // Predicated region
  $region46: #{poker_policy_net.1} parent=0 // pred_check
    _
  $region47: #{poker_policy_net.1} parent=0 // pred_check_branch
    %42 = sbr.rel (0) target = $region49
  $region48: #{poker_policy_net.1} parent=0 // pred_region
    _
  $region49: #{poker_policy_net.1} parent=0 // pred_fallthru
    _
  // Predicated region
  $region50: #{poker_policy_net.1} parent=0 // pred_check
    _
  $region51: #{poker_policy_net.1} parent=0 // pred_check_branch
    %44 = sbr.rel (0) target = $region53
  $region52: #{poker_policy_net.1} parent=0 // pred_region
    _
  $region53: #{poker_policy_net.1} parent=0 // pred_fallthru
    _
  %v48 = vld [vmem:[%s0] sm:$0xf]
  %v49 = vld [vmem:[%s0 + $0x4] sm:$0xf]
  %v50 = vld [vmem:[%s2] sm:$0xf]
  %v51 = vld [vmem:[%s2 + $0x4] sm:$0xf]
  %v52 = vld [vmem:[%s2 + $0x8] sm:$0xf]
  %v53 = vld [vmem:[%s2 + $0xc] sm:$0xf]
  %v54 = vld [vmem:[%s2 + $0x10] sm:$0xf]
  %v55 = vld [vmem:[%s2 + $0x14] sm:$0xf]
  %v56 = vld [vmem:[%s2 + $0x18] sm:$0xf]
  %v57 = vld [vmem:[%s2 + $0x1c] sm:$0xf]
  %v58 = vld [vmem:[%s2 + $0x20] sm:$0xf]
  %v59 = vld [vmem:[%s2 + $0x24] sm:$0xf]
  %v60 = vld [vmem:[%s2 + $0x28] sm:$0xf]
  %v61 = vld [vmem:[%s2 + $0x2c] sm:$0xf]
  %v62 = vld [vmem:[%s2 + $0x30] sm:$0xf]
  %v63 = vld [vmem:[%s2 + $0x34] sm:$0xf]
  %v64 = vld [vmem:[%s2 + $0x38] sm:$0xf]
  %v65 = vld [vmem:[%s2 + $0x3c] sm:$0xf]
  %v66 = vld [vmem:[%s3] sm:$0x1]
  %v68 = vlaneseq
  %v69 = vshrl.u32 %v68, 7
  %v70 = vsub.s32 0, %v69
  %v71 = vrot.slane %v66, %v70
  %v75 = vunpack.c.l.b16 %v48
  %v76 = vunpack.c.l.b16 %v49
  %v77 = vpack.c.b16 %v76, %v75
  %v95 = vunpack.c.l.b16 %v50
  %v96 = vunpack.c.l.b16 %v51
  %v97 = vunpack.c.l.b16 %v52
  %v98 = vunpack.c.l.b16 %v53
  %v99 = vunpack.c.l.b16 %v54
  %v100 = vunpack.c.l.b16 %v55
  %v101 = vunpack.c.l.b16 %v56
  %v102 = vunpack.c.l.b16 %v57
  %v103 = vunpack.c.l.b16 %v58
  %v104 = vunpack.c.l.b16 %v59
  %v105 = vunpack.c.l.b16 %v60
  %v106 = vunpack.c.l.b16 %v61
  %v107 = vunpack.c.l.b16 %v62
  %v108 = vunpack.c.l.b16 %v63
  %v109 = vunpack.c.l.b16 %v64
  %v110 = vunpack.c.l.b16 %v65
  %v111 = vpack.c.b16 %v96, %v95
  %v112 = vpack.c.b16 %v98, %v97
  %v113 = vpack.c.b16 %v100, %v99
  %v114 = vpack.c.b16 %v102, %v101
  %v115 = vpack.c.b16 %v104, %v103
  %v116 = vpack.c.b16 %v106, %v105
  %v117 = vpack.c.b16 %v108, %v107
  %v118 = vpack.c.b16 %v110, %v109
  %127 = vmatprep.subr.bf16.mxu0 0
  %128 = vmatpush1.bf16.msra.mxu0 %v111
  %129 = vmatprep.subr.bf16.mxu0 0
  %130 = vmatpush1.bf16.msra.mxu0 %v112
  %131 = vmatprep.subr.bf16.mxu0 0
  %132 = vmatpush1.bf16.msra.mxu0 %v113
  %133 = vmatprep.subr.bf16.mxu0 0
  %134 = vmatpush1.bf16.msra.mxu0 %v114
  %135 = vmatprep.subr.bf16.mxu0 0
  %136 = vmatpush1.bf16.msra.mxu0 %v115
  %137 = vmatprep.subr.bf16.mxu0 0
  %138 = vmatpush1.bf16.msra.mxu0 %v116
  %139 = vmatprep.subr.bf16.mxu0 0
  %140 = vmatpush1.bf16.msra.mxu0 %v117
  %141 = vmatprep.subr.bf16.mxu0 0
  %142 = vmatpush1.bf16.msra.mxu0 %v118
  %143 = vmatprep.subr.bf16.mxu0 0
  %144 = vmatpush1.bf16.msra.mxu0 0
  %145 = vmatprep.subr.bf16.mxu0 0
  %146 = vmatpush1.bf16.msra.mxu0 0
  %147 = vmatprep.subr.bf16.mxu0 0
  %148 = vmatpush1.bf16.msra.mxu0 0
  %149 = vmatprep.subr.bf16.mxu0 0
  %150 = vmatpush1.bf16.msra.mxu0 0
  %151 = vmatprep.subr.bf16.mxu0 0
  %152 = vmatpush1.bf16.msra.mxu0 0
  %153 = vmatprep.subr.bf16.mxu0 0
  %154 = vmatpush1.bf16.msra.mxu0 0
  %155 = vmatprep.subr.bf16.mxu0 0
  %156 = vmatpush1.bf16.msra.mxu0 0
  %157 = vmatprep.subr.bf16.mxu0 0
  %158 = vmatpush1.bf16.msra.mxu0 0
  %159 = vmatprep.mubr.bf16.mxu0 0
  %160 = vmatmul.mubr.bf16.gmra.mrb[0].mxu0 %v77
  %v161 = vpop.f32.mrb[0].mxu0
  %v162 = vadd.f32 %v71, %v161
  %v163 = vpop.f32.mrb[0].mxu0
  %v164 = vpop.f32.mrb[0].mxu0
  %v165 = vadd.f32 %v71, %v164
  %v166 = vpop.f32.mrb[0].mxu0
  %167 = vdwg.mxu0
  %vm168 = vcmp.gt.f32.partialorder %v162, 0.0
  %vm169 = vcmp.gt.f32.partialorder %v165, 0.0
  %v170 = vmin.f32 %v162, 0.0
  %v171 = vmin.f32 %v165, 0.0
  %v172 = vmul.f32 %v170, 1.442695
  %v173 = vpow.pop %v172
  %v174 = vmul.f32 %v171, 1.442695
  %v175 = vpow.pop %v174
  %v176 = vsub.f32 %v173, 1.0
  %v177 = vsub.f32 %v175, 1.0
  %v178 = vsel %vm168, %v162, %v176
  %v179 = vsel %vm169, %v165, %v177
  %v180 = vlaneseq
  %v181 = vand.u32 %v180, 127
  %vm182 = vcmp.lt.s32.totalorder %v181, 64
  %v183 = vsel %vm182, 1, 0
  %vm184 = vcmp.eq.s32.totalorder %v183, 1
  %v185 = vsel %vm184, %v178, 0.0
  %v186 = vsel %vm184, %v179, 0.0
  %v187 = vsub.f32 %v178, %v185
  %v188 = vsub.f32 %v179, %v186
  %189 = vadd.xlane.f32.xlu0 %v185
  %v190 = vpop.xlane.xlu0 %189
  %191 = vadd.xlane.f32.xlu0 %v186
  %v192 = vpop.xlane.xlu0 %191
  %v193 = vmul.f32 %v190, 0.015625
  %v194 = vmul.f32 %v192, 0.015625
  %195 = vadd.xlane.f32.xlu0 %v187
  %v196 = vpop.xlane.xlu0 %195
  %197 = vadd.xlane.f32.xlu0 %v188
  %v198 = vpop.xlane.xlu0 %197
  %v199 = vmul.f32 %v196, 0.015625
  %v200 = vmul.f32 %v198, 0.015625
  %v201 = vsel %vm184, %v193, %v199
  %v202 = vsel %vm184, %v194, %v200
  %v203 = vsub.f32 %v178, %v201
  %v204 = vsub.f32 %v179, %v202
  %v205 = vmul.f32 %v203, %v203
  %v206 = vmul.f32 %v204, %v204
  %v207 = vsel %vm184, %v205, 0.0
  %v208 = vsel %vm184, %v206, 0.0
  %209 = vadd.xlane.f32.xlu0 %v207
  %v210 = vpop.xlane.xlu0 %209
  %211 = vadd.xlane.f32.xlu0 %v208
  %v212 = vpop.xlane.xlu0 %211
  %v213 = vmul.f32 %v210, 0.015625
  %v214 = vmul.f32 %v212, 0.015625
  %v215 = vsub.f32 %v205, %v207
  %v216 = vsub.f32 %v206, %v208
  %217 = vadd.xlane.f32.xlu0 %v215
  %v218 = vpop.xlane.xlu0 %217
  %219 = vadd.xlane.f32.xlu0 %v216
  %v220 = vpop.xlane.xlu0 %219
  %v221 = vmul.f32 %v218, 0.015625
  %v222 = vmul.f32 %v220, 0.015625
  %v223 = vsel %vm184, %v213, %v221
  %v224 = vsel %vm184, %v214, %v222
  %v225 = vadd.f32 %v223, 1e-05
  %v226 = vadd.f32 %v224, 1e-05
  %v227 = vrsqrt.pop %v225
  %v228 = vrsqrt.pop %v226
  %v229 = vmul.f32 %v203, %v227
  %v230 = vmul.f32 %v204, %v228
  %v231 = vld [vmem:[%s4] sm:$0x1]
  %v233 = vlaneseq
  %v234 = vshrl.u32 %v233, 7
  %v235 = vsub.s32 0, %v234
  %v236 = vrot.slane %v231, %v235
  %v238 = vmul.f32 %v229, %v236
  %v239 = vmul.f32 %v230, %v236
  %v240 = vld [vmem:[%s5] sm:$0x1]
  %v242 = vlaneseq
  %v243 = vshrl.u32 %v242, 7
  %v244 = vsub.s32 0, %v243
  %v245 = vrot.slane %v240, %v244
  %v247 = vadd.f32 %v238, %v245
  %v248 = vadd.f32 %v239, %v245
  %v249 = vpack.c.bf16 %v248, %v247
  %v250 = vld [vmem:[%s6] sm:$0xf]
  %v251 = vld [vmem:[%s6 + $0x4] sm:$0xf]
  %v252 = vld [vmem:[%s6 + $0x8] sm:$0xf]
  %v253 = vld [vmem:[%s6 + $0xc] sm:$0xf]
  %v254 = vld [vmem:[%s6 + $0x10] sm:$0xf]
  %v255 = vld [vmem:[%s6 + $0x14] sm:$0xf]
  %v256 = vld [vmem:[%s6 + $0x18] sm:$0xf]
  %v257 = vld [vmem:[%s6 + $0x1c] sm:$0xf]
  %v258 = vld [vmem:[%s6 + $0x20] sm:$0xf]
  %v259 = vld [vmem:[%s6 + $0x24] sm:$0xf]
  %v260 = vld [vmem:[%s6 + $0x28] sm:$0xf]
  %v261 = vld [vmem:[%s6 + $0x2c] sm:$0xf]
  %v262 = vld [vmem:[%s6 + $0x30] sm:$0xf]
  %v263 = vld [vmem:[%s6 + $0x34] sm:$0xf]
  %v264 = vld [vmem:[%s6 + $0x38] sm:$0xf]
  %v265 = vld [vmem:[%s6 + $0x3c] sm:$0xf]
  %v266 = vld [vmem:[%s7] sm:$0x1]
  %v268 = vlaneseq
  %v269 = vshrl.u32 %v268, 7
  %v270 = vsub.s32 0, %v269
  %v271 = vrot.slane %v266, %v270
  %v289 = vunpack.c.l.b16 %v250
  %v290 = vunpack.c.l.b16 %v251
  %v291 = vunpack.c.l.b16 %v252
  %v292 = vunpack.c.l.b16 %v253
  %v293 = vunpack.c.l.b16 %v254
  %v294 = vunpack.c.l.b16 %v255
  %v295 = vunpack.c.l.b16 %v256
  %v296 = vunpack.c.l.b16 %v257
  %v297 = vunpack.c.l.b16 %v258
  %v298 = vunpack.c.l.b16 %v259
  %v299 = vunpack.c.l.b16 %v260
  %v300 = vunpack.c.l.b16 %v261
  %v301 = vunpack.c.l.b16 %v262
  %v302 = vunpack.c.l.b16 %v263
  %v303 = vunpack.c.l.b16 %v264
  %v304 = vunpack.c.l.b16 %v265
  %v305 = vpack.c.b16 %v290, %v289
  %v306 = vpack.c.b16 %v292, %v291
  %v307 = vpack.c.b16 %v294, %v293
  %v308 = vpack.c.b16 %v296, %v295
  %v309 = vpack.c.b16 %v298, %v297
  %v310 = vpack.c.b16 %v300, %v299
  %v311 = vpack.c.b16 %v302, %v301
  %v312 = vpack.c.b16 %v304, %v303
  %321 = vmatprep.subr.bf16.mxu0 0
  %322 = vmatpush1.bf16.msra.mxu0 %v305
  %323 = vmatprep.subr.bf16.mxu0 0
  %324 = vmatpush1.bf16.msra.mxu0 %v306
  %325 = vmatprep.subr.bf16.mxu0 0
  %326 = vmatpush1.bf16.msra.mxu0 %v307
  %327 = vmatprep.subr.bf16.mxu0 0
  %328 = vmatpush1.bf16.msra.mxu0 %v308
  %329 = vmatprep.subr.bf16.mxu0 0
  %330 = vmatpush1.bf16.msra.mxu0 %v309
  %331 = vmatprep.subr.bf16.mxu0 0
  %332 = vmatpush1.bf16.msra.mxu0 %v310
  %333 = vmatprep.subr.bf16.mxu0 0
  %334 = vmatpush1.bf16.msra.mxu0 %v311
  %335 = vmatprep.subr.bf16.mxu0 0
  %336 = vmatpush1.bf16.msra.mxu0 %v312
  %337 = vmatprep.subr.bf16.mxu0 0
  %338 = vmatpush1.bf16.msra.mxu0 0
  %339 = vmatprep.subr.bf16.mxu0 0
  %340 = vmatpush1.bf16.msra.mxu0 0
  %341 = vmatprep.subr.bf16.mxu0 0
  %342 = vmatpush1.bf16.msra.mxu0 0
  %343 = vmatprep.subr.bf16.mxu0 0
  %344 = vmatpush1.bf16.msra.mxu0 0
  %345 = vmatprep.subr.bf16.mxu0 0
  %346 = vmatpush1.bf16.msra.mxu0 0
  %347 = vmatprep.subr.bf16.mxu0 0
  %348 = vmatpush1.bf16.msra.mxu0 0
  %349 = vmatprep.subr.bf16.mxu0 0
  %350 = vmatpush1.bf16.msra.mxu0 0
  %351 = vmatprep.subr.bf16.mxu0 0
  %352 = vmatpush1.bf16.msra.mxu0 0
  %353 = vmatprep.mubr.bf16.mxu0 0
  %354 = vmatmul.mubr.bf16.gmra.mrb[0].mxu0 %v249
  %v355 = vpop.f32.mrb[0].mxu0
  %v356 = vadd.f32 %v271, %v355
  %v357 = vpop.f32.mrb[0].mxu0
  %v358 = vpop.f32.mrb[0].mxu0
  %v359 = vadd.f32 %v271, %v358
  %v360 = vpop.f32.mrb[0].mxu0
  %361 = vdwg.mxu0
  %v362 = vpack.c.bf16 %v359, %v356
  %v363 = vld [vmem:[%s8] sm:$0xf]
  %v364 = vld [vmem:[%s8 + $0x4] sm:$0xf]
  %v365 = vld [vmem:[%s8 + $0x8] sm:$0xf]
  %v366 = vld [vmem:[%s8 + $0xc] sm:$0xf]
  %v367 = vld [vmem:[%s8 + $0x10] sm:$0xf]
  %v368 = vld [vmem:[%s8 + $0x14] sm:$0xf]
  %v369 = vld [vmem:[%s8 + $0x18] sm:$0xf]
  %v370 = vld [vmem:[%s8 + $0x1c] sm:$0xf]
  %v371 = vld [vmem:[%s9] sm:$0x1]
  %v373 = vlaneseq
  %v374 = vshrl.u32 %v373, 7
  %v375 = vsub.s32 0, %v374
  %v376 = vrot.slane %v371, %v375
  %v386 = vunpack.c.l.b16 %v363
  %v387 = vunpack.c.l.b16 %v364
  %v388 = vunpack.c.l.b16 %v365
  %v389 = vunpack.c.l.b16 %v366
  %v390 = vunpack.c.l.b16 %v367
  %v391 = vunpack.c.l.b16 %v368
  %v392 = vunpack.c.l.b16 %v369
  %v393 = vunpack.c.l.b16 %v370
  %v394 = vpack.c.b16 %v387, %v386
  %v395 = vpack.c.b16 %v389, %v388
  %v396 = vpack.c.b16 %v391, %v390
  %v397 = vpack.c.b16 %v393, %v392
  %vm402 = vcmask 523264
  %v404 = vsel %vm402, %v362, 0
  %406 = vmatprep.subr.bf16.mxu0 0
  %407 = vmatpush1.bf16.msra.mxu0 %v394
  %408 = vmatprep.subr.bf16.mxu0 0
  %409 = vmatpush1.bf16.msra.mxu0 %v395
  %410 = vmatprep.subr.bf16.mxu0 0
  %411 = vmatpush1.bf16.msra.mxu0 %v396
  %412 = vmatprep.subr.bf16.mxu0 0
  %413 = vmatpush1.bf16.msra.mxu0 %v397
  %414 = vmatprep.subr.bf16.mxu0 0
  %415 = vmatpush1.bf16.msra.mxu0 0
  %416 = vmatprep.subr.bf16.mxu0 0
  %417 = vmatpush1.bf16.msra.mxu0 0
  %418 = vmatprep.subr.bf16.mxu0 0
  %419 = vmatpush1.bf16.msra.mxu0 0
  %420 = vmatprep.subr.bf16.mxu0 0
  %421 = vmatpush1.bf16.msra.mxu0 0
  %422 = vmatprep.subr.bf16.mxu0 0
  %423 = vmatpush1.bf16.msra.mxu0 0
  %424 = vmatprep.subr.bf16.mxu0 0
  %425 = vmatpush1.bf16.msra.mxu0 0
  %426 = vmatprep.subr.bf16.mxu0 0
  %427 = vmatpush1.bf16.msra.mxu0 0
  %428 = vmatprep.subr.bf16.mxu0 0
  %429 = vmatpush1.bf16.msra.mxu0 0
  %430 = vmatprep.subr.bf16.mxu0 0
  %431 = vmatpush1.bf16.msra.mxu0 0
  %432 = vmatprep.subr.bf16.mxu0 0
  %433 = vmatpush1.bf16.msra.mxu0 0
  %434 = vmatprep.subr.bf16.mxu0 0
  %435 = vmatpush1.bf16.msra.mxu0 0
  %436 = vmatprep.subr.bf16.mxu0 0
  %437 = vmatpush1.bf16.msra.mxu0 0
  %438 = vmatprep.mubr.bf16.mxu0 0
  %439 = vmatmul.mubr.bf16.gmra.mrb[0].mxu0 %v404
  %v440 = vpop.f32.mrb[0].mxu0
  %v441 = vadd.f32 %v376, %v440
  %v442 = vpop.f32.mrb[0].mxu0
  %v443 = vpop.f32.mrb[0].mxu0
  %v444 = vadd.f32 %v376, %v443
  %v445 = vpop.f32.mrb[0].mxu0
  %446 = vdwg.mxu0
  %v447 = vmax.f32 %v441, 0.0
  %v448 = vmax.f32 %v444, 0.0
  %v449 = vpack.c.bf16 %v448, %v447
  %v450 = vld [vmem:[%s10] sm:$0xf]
  %v451 = vld [vmem:[%s10 + $0x4] sm:$0xf]
  %v452 = vld [vmem:[%s10 + $0x8] sm:$0xf]
  %v453 = vld [vmem:[%s10 + $0xc] sm:$0xf]
  %v454 = vld [vmem:[%s10 + $0x10] sm:$0xf]
  %v455 = vld [vmem:[%s10 + $0x14] sm:$0xf]
  %v456 = vld [vmem:[%s10 + $0x18] sm:$0xf]
  %v457 = vld [vmem:[%s10 + $0x1c] sm:$0xf]
  %v458 = vld [vmem:[%s10 + $0x20] sm:$0xf]
  %v459 = vld [vmem:[%s10 + $0x24] sm:$0xf]
  %v460 = vld [vmem:[%s10 + $0x28] sm:$0xf]
  %v461 = vld [vmem:[%s10 + $0x2c] sm:$0xf]
  %v462 = vld [vmem:[%s10 + $0x30] sm:$0xf]
  %v463 = vld [vmem:[%s10 + $0x34] sm:$0xf]
  %v464 = vld [vmem:[%s10 + $0x38] sm:$0xf]
  %v465 = vld [vmem:[%s10 + $0x3c] sm:$0xf]
  %v466 = vld [vmem:[%s11] sm:$0x1]
  %v468 = vlaneseq
  %v469 = vshrl.u32 %v468, 7
  %v470 = vsub.s32 0, %v469
  %v471 = vrot.slane %v466, %v470
  %v489 = vunpack.c.l.b16 %v450
  %v490 = vunpack.c.l.b16 %v451
  %v491 = vunpack.c.l.b16 %v452
  %v492 = vunpack.c.l.b16 %v453
  %v493 = vunpack.c.l.b16 %v454
  %v494 = vunpack.c.l.b16 %v455
  %v495 = vunpack.c.l.b16 %v456
  %v496 = vunpack.c.l.b16 %v457
  %v497 = vunpack.c.l.b16 %v458
  %v498 = vunpack.c.l.b16 %v459
  %v499 = vunpack.c.l.b16 %v460
  %v500 = vunpack.c.l.b16 %v461
  %v501 = vunpack.c.l.b16 %v462
  %v502 = vunpack.c.l.b16 %v463
  %v503 = vunpack.c.l.b16 %v464
  %v504 = vunpack.c.l.b16 %v465
  %v505 = vpack.c.b16 %v490, %v489
  %v506 = vpack.c.b16 %v492, %v491
  %v507 = vpack.c.b16 %v494, %v493
  %v508 = vpack.c.b16 %v496, %v495
  %v509 = vpack.c.b16 %v498, %v497
  %v510 = vpack.c.b16 %v500, %v499
  %v511 = vpack.c.b16 %v502, %v501
  %v512 = vpack.c.b16 %v504, %v503
  %521 = vmatprep.subr.bf16.mxu0 0
  %522 = vmatpush1.bf16.msra.mxu0 %v505
  %523 = vmatprep.subr.bf16.mxu0 0
  %524 = vmatpush1.bf16.msra.mxu0 %v506
  %525 = vmatprep.subr.bf16.mxu0 0
  %526 = vmatpush1.bf16.msra.mxu0 %v507
  %527 = vmatprep.subr.bf16.mxu0 0
  %528 = vmatpush1.bf16.msra.mxu0 %v508
  %529 = vmatprep.subr.bf16.mxu0 0
  %530 = vmatpush1.bf16.msra.mxu0 %v509
  %531 = vmatprep.subr.bf16.mxu0 0
  %532 = vmatpush1.bf16.msra.mxu0 %v510
  %533 = vmatprep.subr.bf16.mxu0 0
  %534 = vmatpush1.bf16.msra.mxu0 %v511
  %535 = vmatprep.subr.bf16.mxu0 0
  %536 = vmatpush1.bf16.msra.mxu0 %v512
  %537 = vmatprep.subr.bf16.mxu0 0
  %538 = vmatpush1.bf16.msra.mxu0 0
  %539 = vmatprep.subr.bf16.mxu0 0
  %540 = vmatpush1.bf16.msra.mxu0 0
  %541 = vmatprep.subr.bf16.mxu0 0
  %542 = vmatpush1.bf16.msra.mxu0 0
  %543 = vmatprep.subr.bf16.mxu0 0
  %544 = vmatpush1.bf16.msra.mxu0 0
  %545 = vmatprep.subr.bf16.mxu0 0
  %546 = vmatpush1.bf16.msra.mxu0 0
  %547 = vmatprep.subr.bf16.mxu0 0
  %548 = vmatpush1.bf16.msra.mxu0 0
  %549 = vmatprep.subr.bf16.mxu0 0
  %550 = vmatpush1.bf16.msra.mxu0 0
  %551 = vmatprep.subr.bf16.mxu0 0
  %552 = vmatpush1.bf16.msra.mxu0 0
  %553 = vmatprep.mubr.bf16.mxu0 0
  %554 = vmatmul.mubr.bf16.gmra.mrb[0].mxu0 %v449
  %v555 = vpop.f32.mrb[0].mxu0
  %v556 = vadd.f32 %v471, %v555
  %v557 = vpop.f32.mrb[0].mxu0
  %v558 = vpop.f32.mrb[0].mxu0
  %v559 = vadd.f32 %v471, %v558
  %v560 = vpop.f32.mrb[0].mxu0
  %561 = vdwg.mxu0
  %vm562 = vcmp.lt.s32.totalorder %v181, 4
  %s563 = sld [smem:[#allocation2]]
  %v564 = vstv %s563
  %v565 = vrcp.pop %v564
  %s566 = vtos %v565
  %v567 = vtanh.pop %v556
  %v568 = vtanh.pop %v559
  %v569 = vsub.f32 %v556, %v567
  %v570 = vsub.f32 %v559, %v568
  %v571 = vstv %s566
  %v572 = vmul.f32 %v569, %v571
  %v573 = vmul.f32 %v570, %v571
  %v574 = vld [vmem:[%s1] sm:$0xf]
  %v575 = vld [vmem:[%s1 + $0x4] sm:$0xf]
  %vm576 = vcmp.ne.bf16.partialorder %v574, 0
  %vm577 = vcmp.ne.bf16.partialorder %v575, 0
  %v578 = vsel %vm576, 65537, 0
  %v579 = vsel %vm577, 65537, 0
  %v580 = vunpack.c.l.b16 %v578
  %v581 = vunpack.c.l.b16 %v579
  %vm582 = vcmp.ne.s32.totalorder %v580, 0
  %vm583 = vcmp.ne.s32.totalorder %v581, 0
  %v584 = vsel %vm582, %v572, -1e+08
  %v585 = vsel %vm583, %v573, -1e+08
  %v586 = vsel %vm562, %v584, -1e+09
  %v587 = vsel %vm562, %v585, -1e+09
  %vm588 = vcmask 64512
  %v589 = vsel %vm588, %v586, -inf
  %590 = vmax.xlane.f32.xlu0 %v589
  %v591 = vpop.xlane.xlu0 %590
  %v592 = vsel %vm588, %v587, -inf
  %593 = vmax.xlane.f32.xlu0 %v592
  %v594 = vpop.xlane.xlu0 %593
  %v595 = vsub.f32 %v586, %v591
  %v596 = vsub.f32 %v587, %v594
  %v597 = vmul.f32 %v595, 1.442695
  %v598 = vpow.pop %v597
  %v599 = vmul.f32 %v596, 1.442695
  %v600 = vpow.pop %v599
  %v601 = vsel %vm588, %v598, 0.0
  %602 = vadd.xlane.f32.xlu0 %v601
  %v603 = vpop.xlane.xlu0 %602
  %v604 = vsel %vm588, %v600, 0.0
  %605 = vadd.xlane.f32.xlu0 %v604
  %v606 = vpop.xlane.xlu0 %605
  %v607 = vrcp.pop %v603
  %v608 = vrcp.pop %v606
  %v609 = vmul.f32 %v598, %v607
  %v610 = vmul.f32 %v600, %v608
  %v611 = vsub.f32 0.0, %v556
  %v612 = vsub.f32 0.0, %v559
  %v613 = vmul.f32 %v611, 1.442695
  %v614 = vpow.pop %v613
  %v615 = vmul.f32 %v612, 1.442695
  %v616 = vpow.pop %v615
  %v617 = vadd.f32 %v614, 1.0
  %v618 = vadd.f32 %v616, 1.0
  %v619 = vrcp.pop %v617
  %v620 = vrcp.pop %v618
  %vm621 = vcmp.eq.s32.totalorder %v181, 4
  %vm622 = vcmp.eq.s32.totalorder %v181, 5
  %v623 = vsel %vm622, %v567, 0.0
  %v624 = vsel %vm622, %v568, 0.0
  %v625 = vsel %vm621, %v619, %v623
  %v626 = vsel %vm621, %v620, %v624
  %v627 = vsel %vm562, %v609, %v625
  %v628 = vsel %vm562, %v610, %v626
  %629 = vst.msk [vmem:[%s13] sm:$0xff] %vm588, %v627
  %630 = vst.msk [vmem:[%s13 + $0x8] sm:$0xff] %vm588, %v628
  // Predicated region
  $region54: #{poker_policy_net.1} parent=0 // pred_check
    _
  $region55: #{poker_policy_net.1} parent=0 // pred_check_branch
    %632 = sbr.rel (0) target = $region57
  $region56: #{poker_policy_net.1} parent=0 // pred_region
    _
  $region57: #{poker_policy_net.1} parent=0 // pred_fallthru
    _
  // Predicated region
  $region58: #{poker_policy_net.1} parent=0 // pred_check
    _
  $region59: #{poker_policy_net.1} parent=0 // pred_check_branch
    %634 = sbr.rel (0) target = $region61
  $region60: #{poker_policy_net.1} parent=0 // pred_region
    _
  $region61: #{poker_policy_net.1} parent=0 // pred_fallthru
    _

</llo_original>
